<compile_context>
chip_gen: v5e
topology: v5e:2x2
jax: 0.10.0
libtpu: 0.0.40
codegen_flags: <defaults>
</compile_context>

<pallas_src>
import functools

import jax
import jax.numpy as jnp
from jax.experimental import pallas as pl
from jax.experimental.pallas import tpu as pltpu


def _pick_bc(B, cap):
    """Single batch block up to `cap` rows; split only when B exceeds it."""
    if B <= cap:
        return B
    d = (cap // 8) * 8
    while d >= 8:
        if B % d == 0:
            return d
        d -= 8
    return B   # fallback: one full-batch block (block dim == full dim is legal)


def leaky_rnn_kernel(*refs, steps, one_minus_alpha, unroll, has_noise):
    """One (batch block, time chunk) grid step of the leaky-RNN recurrence.

    inputs : u_ref (Tc, Bc, N_I), in_w_ref (N_I, N) [= alpha * In.T, f32],
             j_ref (N, N) [= (alpha/N) * (U @ V.T), matmul dtype],
             h0_ref (1, N), [noise_ref (Tc, Bc, N) = alpha*g_rec*noise]
    output : h_out_ref (Tc, Bc, N)   h_{t+1} for t in this chunk
    scratch: drive (Tc, Bc, N) VMEM, h_carry (Bc, N) VMEM (persists over time
             chunks -- time MUST be the last, "arbitrary", grid axis).
    """
    if has_noise:
        (u_ref, in_w_ref, j_ref, h0_ref, noise_ref,
         h_out_ref, drive, h_carry) = refs
    else:
        (u_ref, in_w_ref, j_ref, h0_ref,
         h_out_ref, drive, h_carry) = refs
        noise_ref = None

    f32 = jnp.float32

    # (Re)initialize the carried hidden state at the first time chunk of each
    # batch block.  Correctness of the carry relies on the time axis being the
    # LAST grid axis with "arbitrary" semantics (sequential per batch block).
    @pl.when(pl.program_id(1) == 0)
    def _init():
        h_carry[...] = jnp.broadcast_to(h0_ref[...], h_carry.shape).astype(f32)

    in_w = in_w_ref[...]        # (N_I, N), f32, pre-scaled by alpha
    J = j_ref[...]              # (N, N), pre-scaled by alpha / N
    mm_dtype = J.dtype
    n_in = in_w.shape[0]
    # Hoisted once per chunk (loop-invariant): the rows of alpha * In.T.
    w_rows = [in_w[i:i + 1, :] for i in range(n_in)]        # each (1, N)

    # ---- per-chunk input projection (off the serial critical path) --------
    # drive[t] = alpha * (u[t] @ In.T) (+ alpha * g_rec * noise[t]),
    # done as exact-f32 VPU multiply-adds over the tiny N_I contraction.
    def proj(t, carry):
        u_t = u_ref[t]                                       # (Bc, N_I)
        d = u_t[:, 0:1] * w_rows[0]
        for i in range(1, n_in):
            d = d + u_t[:, i:i + 1] * w_rows[i]
        if noise_ref is not None:
            d = d + noise_ref[t]
        drive[t] = d
        return carry

    jax.lax.fori_loop(0, steps, proj, 0, unroll=unroll)

    # ---- serial leaky recurrence: tanh -> 1 MXU matmul -> fused update ----
    def step(t, h):
        act = jnp.tanh(h).astype(mm_dtype)
        # rec[b, u] = sum_v J_scaled[u, v] * tanh(h)[b, v]
        rec = jax.lax.dot_general(act, J, (((1,), (1,)), ((), ())),
                                  preferred_element_type=f32)
        h_new = one_minus_alpha * h + rec + drive[t]
        h_out_ref[t] = h_new
        return h_new

    h = jax.lax.fori_loop(0, steps, step, h_carry[...], unroll=unroll)
    h_carry[...] = h


def leaky_rnn_forward(u, In, Out, U=None, V=None, h0=None, *, tau, dt=20.0,
                      g_rec=0.0, noise=None, J=None,
                      matmul_dtype=jnp.bfloat16, time_chunk=128,
                      batch_chunk_cap=256, interpret=False):
    """LeakyRNN forward. u: (B, T, N_I) (PyTorch convention).

    Returns (y_t, h_t) with shapes (B, T+1, N_O) and (B, T+1, N), matching
    the module's `get_Encoder=True` outputs.
    """
    u = jnp.asarray(u, jnp.float32)
    B, T, N_I = u.shape
    N = In.shape[0]
    alpha = float(dt) / float(tau)

    In = jnp.asarray(In, jnp.float32)
    Out = jnp.asarray(Out, jnp.float32)
    h0_2d = jnp.asarray(h0, jnp.float32).reshape(1, N)

    # ---- one-shot precompute, hoisted off the serial recurrence -----------
    if J is None:   # low-rank parameterization (hyper.N_R != -1)
        J = jnp.asarray(U, jnp.float32) @ jnp.asarray(V, jnp.float32).T
    else:           # dense parameterization (hyper.N_R == -1)
        J = jnp.asarray(J, jnp.float32)
    J_scaled = ((alpha / N) * J).astype(matmul_dtype)         # (N, N)
    In_scaled = (alpha * In.T).astype(jnp.float32)            # (N_I, N), exact f32

    has_noise = (noise is not None) and (g_rec != 0.0)

    # ---- grid sizing -------------------------------------------------------
    Bc = _pick_bc(B, batch_chunk_cap)
    nB = B // Bc

    Tc = max(1, min(T, time_chunk))

    def vmem_est(tc):   # double-buffered streamed blocks + scratches, bytes
        per = tc * Bc * 4
        stream = 2 * per * (N_I + N + (N if has_noise else 0))
        return stream + per * N + Bc * N * 4

    budget = 36 * 1024 * 1024          # fits v7x's 64 MiB with headroom
    while Tc > 8 and vmem_est(Tc) > budget:
        Tc = max(8, Tc // 2)

    T_pad = ((T + Tc - 1) // Tc) * Tc  # never let Tc collapse to 1; pad T
    nT = T_pad // Tc
    unroll = True if Tc <= 32 else 8

    # time-major inputs (tiny XLA transposes/pads, off the recurrence)
    u_tm = jnp.transpose(u, (1, 0, 2))                        # (T, B, N_I)
    if T_pad != T:
        u_tm = jnp.pad(u_tm, ((0, T_pad - T), (0, 0), (0, 0)))

    operands = [u_tm, In_scaled, J_scaled, h0_2d]
    in_specs = [
        pl.BlockSpec((Tc, Bc, N_I), lambda b, t: (t, b, 0)),  # u chunk
        pl.BlockSpec((N_I, N), lambda b, t: (0, 0)),          # alpha * In.T
        pl.BlockSpec((N, N), lambda b, t: (0, 0)),            # J_scaled
        pl.BlockSpec((1, N), lambda b, t: (0, 0)),            # h0
    ]
    if has_noise:
        noise_tm = (alpha * float(g_rec)) * jnp.transpose(
            jnp.asarray(noise, jnp.float32), (1, 0, 2))       # (T, B, N)
        if T_pad != T:
            noise_tm = jnp.pad(noise_tm, ((0, T_pad - T), (0, 0), (0, 0)))
        operands.append(noise_tm)
        in_specs.append(pl.BlockSpec((Tc, Bc, N), lambda b, t: (t, b, 0)))

    kernel = functools.partial(leaky_rnn_kernel, steps=Tc,
                               one_minus_alpha=1.0 - alpha,
                               unroll=unroll, has_noise=has_noise)

    # Grid = (batch blocks "parallel", time chunks "arbitrary").  The carried
    # hidden state lives in a persistent VMEM scratch, so the time axis must
    # remain last + "arbitrary".
    grid_spec = pltpu.PrefetchScalarGridSpec(
        num_scalar_prefetch=0,
        grid=(nB, nT),
        in_specs=in_specs,
        out_specs=pl.BlockSpec((Tc, Bc, N), lambda b, t: (t, b, 0)),
        scratch_shapes=[pltpu.VMEM((Tc, Bc, N), jnp.float32),   # drive
                        pltpu.VMEM((Bc, N), jnp.float32)],      # carried h
    )

    h_tm = pl.pallas_call(
        kernel,
        grid_spec=grid_spec,
        out_shape=jax.ShapeDtypeStruct((T_pad, B, N), jnp.float32),
        compiler_params=pltpu.CompilerParams(
            dimension_semantics=("parallel", "arbitrary"),
            vmem_limit_bytes=48 * 1024 * 1024),
        interpret=interpret,
    )(*operands)

    # ---- stitch back to the module's (B, T+1, .) convention ---------------
    h_bt = jnp.transpose(h_tm[:T], (1, 0, 2))                  # (B, T, N)
    h_t = jnp.concatenate(
        [jnp.broadcast_to(h0_2d.reshape(1, 1, N), (B, 1, N)), h_bt], axis=1)
    # Readout done once, lane-dense, fully parallel (not on the recurrence).
    y = jnp.einsum('no,btn->bto', Out, jnp.tanh(h_t)) / N      # (B, T+1, N_O)
    return y, h_t


def leaky_rnn_ref(u, In, Out, U, V, h0, *, tau, dt=20.0, g_rec=0.0, noise=None):
    """Pure-JAX reference matching the PyTorch forward pass."""
    B, T, _ = u.shape
    N = In.shape[0]
    alpha = float(dt) / float(tau)
    if noise is None:
        noise = jnp.zeros((B, T, N), jnp.float32)
    noise = g_rec * noise
    J = U @ V.T
    hp = jax.lax.Precision.HIGHEST
    h = jnp.broadcast_to(h0[None, :], (B, N))
    hs = [h]
    for t in range(T):
        h = (1.0 - alpha) * h + alpha * (
            jnp.einsum('uv,bv->bu', J, jnp.tanh(h), precision=hp) / N
            + jnp.einsum('ni,bi->bn', In, u[:, t], precision=hp)
            + noise[:, t])
        hs.append(h)
    h_t = jnp.stack(hs, axis=1)                                # (B, T+1, N)
    y = jnp.einsum('no,btn->bto', Out, jnp.tanh(h_t)) / N
    return y, h_t


if __name__ == "__main__":
    # Hyper-params consistent with the module: N, N_I, N_R, N_O, tau, act_func=tanh
    B, T, N, N_I, N_O, N_R = 2, 8, 32, 4, 3, 8
    tau, dt, g = 100.0, 20.0, 0.01            # LeakyRNN.g = 0.01

    key = jax.random.PRNGKey(0)
    k = jax.random.split(key, 6)
    In = jax.random.normal(k[0], (N, N_I), jnp.float32)       # trandn(N, N_I)
    Out = jax.random.normal(k[1], (N, N_O), jnp.float32)      # trandn(N, N_O)
    U = g * jax.random.normal(k[2], (N, N_R), jnp.float32)    # g * trandn(N, N_R)
    V = g * jax.random.normal(k[3], (N, N_R), jnp.float32)    # g * trandn(N, N_R)
    h0 = jnp.zeros((N,), jnp.float32)
    u = jax.random.normal(k[4], (B, T, N_I), jnp.float32)
    noise = jax.random.normal(k[5], (B, T, N), jnp.float32)

    y_ref, h_ref = leaky_rnn_ref(u, In, Out, U, V, h0, tau=tau, dt=dt)

    # 1) deterministic forward (bf16 recurrent matmul, readout in epilogue)
    y, h_t = leaky_rnn_forward(u, In, Out, U, V, h0, tau=tau, dt=dt)
    jax.block_until_ready((y, h_t))
    assert y.shape == (B, T + 1, N_O)
    assert h_t.shape == (B, T + 1, N)
    assert jnp.allclose(y, y_ref, atol=1e-3, rtol=1e-3)
    assert jnp.allclose(h_t, h_ref, atol=1e-3, rtol=1e-3)

    # 2) multi-chunk time grid (exercises the persistent-h VMEM carry), f32 MXU
    y2, h2 = leaky_rnn_forward(u, In, Out, U, V, h0, tau=tau, dt=dt,
                               time_chunk=4, matmul_dtype=jnp.float32)
    jax.block_until_ready((y2, h2))
    assert jnp.allclose(y2, y_ref, atol=1e-3, rtol=1e-3)
    assert jnp.allclose(h2, h_ref, atol=1e-3, rtol=1e-3)

    # 3) noisy forward (pre-scaled noise streamed and folded in-kernel)
    y3, h3 = leaky_rnn_forward(u, In, Out, U, V, h0, tau=tau, dt=dt,
                               g_rec=0.05, noise=noise)
    jax.block_until_ready((y3, h3))
    y3_ref, h3_ref = leaky_rnn_ref(u, In, Out, U, V, h0, tau=tau, dt=dt,
                                   g_rec=0.05, noise=noise)
    assert jnp.allclose(y3, y3_ref, atol=1e-3, rtol=1e-3)
    assert jnp.allclose(h3, h3_ref, atol=1e-3, rtol=1e-3)

    # 4) forced batch-block split (exercises the "parallel" batch axis + carry
    #    re-init per batch block); default policy would keep B=16 in one block.
    B2, T2 = 16, 4
    u4 = jax.random.normal(k[4], (B2, T2, N_I), jnp.float32)
    y4, h4 = leaky_rnn_forward(u4, In, Out, U, V, h0, tau=tau, dt=dt,
                               time_chunk=2, batch_chunk_cap=8)
    jax.block_until_ready((y4, h4))
    y4_ref, h4_ref = leaky_rnn_ref(u4, In, Out, U, V, h0, tau=tau, dt=dt)
    assert jnp.allclose(y4, y4_ref, atol=1e-3, rtol=1e-3)
    assert jnp.allclose(h4, h4_ref, atol=1e-3, rtol=1e-3)

    # 5) awkward T (not a multiple of the chunk): exercises the T-padding path
    T5 = 7
    u5 = jax.random.normal(k[5], (B, T5, N_I), jnp.float32)
    y5, h5 = leaky_rnn_forward(u5, In, Out, U, V, h0, tau=tau, dt=dt,
                               time_chunk=4)
    jax.block_until_ready((y5, h5))
    y5_ref, h5_ref = leaky_rnn_ref(u5, In, Out, U, V, h0, tau=tau, dt=dt)
    assert y5.shape == (B, T5 + 1, N_O) and h5.shape == (B, T5 + 1, N)
    assert jnp.allclose(y5, y5_ref, atol=1e-3, rtol=1e-3)
    assert jnp.allclose(h5, h5_ref, atol=1e-3, rtol=1e-3)

    print("KERNEL_OK")
</pallas_src>

<mosaic_0001>
module attributes {stable_mosaic.version = 11 : i64} {
  func.func @leaky_rnn_kernel(%arg0: i32, %arg1: i32, %arg2: memref<8x2x4xf32, #tpu.memory_space<vmem>>, %arg3: memref<4x32xf32, #tpu.memory_space<vmem>>, %arg4: memref<32x32xbf16, #tpu.memory_space<vmem>>, %arg5: memref<1x32xf32, #tpu.memory_space<vmem>>, %arg6: memref<8x2x32xf32, #tpu.memory_space<vmem>>, %arg7: memref<8x2x32xf32, #tpu.memory_space<vmem>>, %arg8: memref<2x32xf32, #tpu.memory_space<vmem>>) attributes {dimension_semantics = [#tpu.dimension_semantics<parallel>, #tpu.dimension_semantics<arbitrary>], iteration_bounds = array<i64: 1, 1>, scalar_prefetch = 0 : i64, scratch_operands = 2 : i64, tpu.core_type = #tpu.core_type<tc>, window_params = [{transform_indices = @transform_0, window_bounds = array<i64: 8, 2, 4>}, {pipeline_mode = #tpu.pipeline_mode<synchronous>, transform_indices = @transform_1, window_bounds = array<i64: 4, 32>}, {pipeline_mode = #tpu.pipeline_mode<synchronous>, transform_indices = @transform_2, window_bounds = array<i64: 32, 32>}, {pipeline_mode = #tpu.pipeline_mode<synchronous>, transform_indices = @transform_3, window_bounds = array<i64: 1, 32>}, {transform_indices = @transform_4, window_bounds = array<i64: 8, 2, 32>}]} {
    %c0_i32 = arith.constant 0 : i32
    %0 = arith.cmpi eq, %arg1, %c0_i32 : i32
    %1 = arith.extui %0 : i1 to i32
    %c0_i32_0 = arith.constant 0 : i32
    %2 = arith.cmpi ne, %1, %c0_i32_0 : i32
    scf.if %2 {
      %c0_97 = arith.constant 0 : index
      %c0_98 = arith.constant 0 : index
      %331 = vector.load %arg5[%c0_97, %c0_98] : memref<1x32xf32, #tpu.memory_space<vmem>>, vector<1x32xf32>
      %332 = vector.shape_cast %331 : vector<1x32xf32> to vector<1x32xf32>
      %333 = vector.broadcast %332 : vector<1x32xf32> to vector<2x32xf32>
      %c0_99 = arith.constant 0 : index
      %c0_100 = arith.constant 0 : index
      %334 = vector.load %arg8[%c0_99, %c0_100] : memref<2x32xf32, #tpu.memory_space<vmem>>, vector<2x32xf32>
      tpu.vector_store %arg8[%c0_99, %c0_100], %333 {strides = array<i32>} : memref<2x32xf32, #tpu.memory_space<vmem>>, vector<2x32xf32>,
    } else {
    }
    %c0 = arith.constant 0 : index
    %c0_1 = arith.constant 0 : index
    %3 = vector.load %arg3[%c0, %c0_1] : memref<4x32xf32, #tpu.memory_space<vmem>>, vector<4x32xf32>
    %c0_2 = arith.constant 0 : index
    %c0_3 = arith.constant 0 : index
    %4 = vector.load %arg4[%c0_2, %c0_3] : memref<32x32xbf16, #tpu.memory_space<vmem>>, vector<32x32xbf16>
    %5 = vector.extract_strided_slice %3 {offsets = [0, 0], sizes = [1, 32], strides = [1, 1]} : vector<4x32xf32> to vector<1x32xf32>
    %6 = vector.extract_strided_slice %3 {offsets = [1, 0], sizes = [1, 32], strides = [1, 1]} : vector<4x32xf32> to vector<1x32xf32>
    %7 = vector.extract_strided_slice %3 {offsets = [2, 0], sizes = [1, 32], strides = [1, 1]} : vector<4x32xf32> to vector<1x32xf32>
    %8 = vector.extract_strided_slice %3 {offsets = [3, 0], sizes = [1, 32], strides = [1, 1]} : vector<4x32xf32> to vector<1x32xf32>
    %c0_i32_4 = arith.constant 0 : i32
    %9 = arith.index_cast %c0_i32_4 : i32 to index
    %c0_5 = arith.constant 0 : index
    %c0_6 = arith.constant 0 : index
    %10 = vector.load %arg2[%9, %c0_5, %c0_6] : memref<8x2x4xf32, #tpu.memory_space<vmem>>, vector<1x2x4xf32>
    %11 = vector.shape_cast %10 : vector<1x2x4xf32> to vector<2x4xf32>
    %12 = vector.extract_strided_slice %11 {offsets = [0, 0], sizes = [2, 1], strides = [1, 1]} : vector<2x4xf32> to vector<2x1xf32>
    %13 = vector.broadcast %12 : vector<2x1xf32> to vector<2x32xf32>
    %14 = vector.broadcast %5 : vector<1x32xf32> to vector<2x32xf32>
    %15 = arith.mulf %13, %14 : vector<2x32xf32>
    %16 = vector.extract_strided_slice %11 {offsets = [0, 1], sizes = [2, 1], strides = [1, 1]} : vector<2x4xf32> to vector<2x1xf32>
    %17 = vector.broadcast %16 : vector<2x1xf32> to vector<2x32xf32>
    %18 = vector.broadcast %6 : vector<1x32xf32> to vector<2x32xf32>
    %19 = arith.mulf %17, %18 : vector<2x32xf32>
    %20 = arith.addf %15, %19 : vector<2x32xf32>
    %21 = vector.extract_strided_slice %11 {offsets = [0, 2], sizes = [2, 1], strides = [1, 1]} : vector<2x4xf32> to vector<2x1xf32>
    %22 = vector.broadcast %21 : vector<2x1xf32> to vector<2x32xf32>
    %23 = vector.broadcast %7 : vector<1x32xf32> to vector<2x32xf32>
    %24 = arith.mulf %22, %23 : vector<2x32xf32>
    %25 = arith.addf %20, %24 : vector<2x32xf32>
    %26 = vector.extract_strided_slice %11 {offsets = [0, 3], sizes = [2, 1], strides = [1, 1]} : vector<2x4xf32> to vector<2x1xf32>
    %27 = vector.broadcast %26 : vector<2x1xf32> to vector<2x32xf32>
    %28 = vector.broadcast %8 : vector<1x32xf32> to vector<2x32xf32>
    %29 = arith.mulf %27, %28 : vector<2x32xf32>
    %30 = arith.addf %25, %29 : vector<2x32xf32>
    %31 = arith.index_cast %c0_i32_4 : i32 to index
    %c0_7 = arith.constant 0 : index
    %c0_8 = arith.constant 0 : index
    %32 = vector.load %arg7[%31, %c0_7, %c0_8] : memref<8x2x32xf32, #tpu.memory_space<vmem>>, vector<1x2x32xf32>
    %33 = vector.shape_cast %32 : vector<1x2x32xf32> to vector<2x32xf32>
    %34 = vector.shape_cast %30 : vector<2x32xf32> to vector<1x2x32xf32>
    tpu.vector_store %arg7[%31, %c0_7, %c0_8], %34 {strides = array<i32>} : memref<8x2x32xf32, #tpu.memory_space<vmem>>, vector<1x2x32xf32>,
    %c1_i32 = arith.constant 1 : i32
    %35 = arith.index_cast %c1_i32 : i32 to index
    %c0_9 = arith.constant 0 : index
    %c0_10 = arith.constant 0 : index
    %36 = vector.load %arg2[%35, %c0_9, %c0_10] : memref<8x2x4xf32, #tpu.memory_space<vmem>>, vector<1x2x4xf32>
    %37 = vector.shape_cast %36 : vector<1x2x4xf32> to vector<2x4xf32>
    %38 = vector.extract_strided_slice %37 {offsets = [0, 0], sizes = [2, 1], strides = [1, 1]} : vector<2x4xf32> to vector<2x1xf32>
    %39 = vector.broadcast %38 : vector<2x1xf32> to vector<2x32xf32>
    %40 = vector.broadcast %5 : vector<1x32xf32> to vector<2x32xf32>
    %41 = arith.mulf %39, %40 : vector<2x32xf32>
    %42 = vector.extract_strided_slice %37 {offsets = [0, 1], sizes = [2, 1], strides = [1, 1]} : vector<2x4xf32> to vector<2x1xf32>
    %43 = vector.broadcast %42 : vector<2x1xf32> to vector<2x32xf32>
    %44 = vector.broadcast %6 : vector<1x32xf32> to vector<2x32xf32>
    %45 = arith.mulf %43, %44 : vector<2x32xf32>
    %46 = arith.addf %41, %45 : vector<2x32xf32>
    %47 = vector.extract_strided_slice %37 {offsets = [0, 2], sizes = [2, 1], strides = [1, 1]} : vector<2x4xf32> to vector<2x1xf32>
    %48 = vector.broadcast %47 : vector<2x1xf32> to vector<2x32xf32>
    %49 = vector.broadcast %7 : vector<1x32xf32> to vector<2x32xf32>
    %50 = arith.mulf %48, %49 : vector<2x32xf32>
    %51 = arith.addf %46, %50 : vector<2x32xf32>
    %52 = vector.extract_strided_slice %37 {offsets = [0, 3], sizes = [2, 1], strides = [1, 1]} : vector<2x4xf32> to vector<2x1xf32>
    %53 = vector.broadcast %52 : vector<2x1xf32> to vector<2x32xf32>
    %54 = vector.broadcast %8 : vector<1x32xf32> to vector<2x32xf32>
    %55 = arith.mulf %53, %54 : vector<2x32xf32>
    %56 = arith.addf %51, %55 : vector<2x32xf32>
    %57 = arith.index_cast %c1_i32 : i32 to index
    %c0_11 = arith.constant 0 : index
    %c0_12 = arith.constant 0 : index
    %58 = vector.load %arg7[%57, %c0_11, %c0_12] : memref<8x2x32xf32, #tpu.memory_space<vmem>>, vector<1x2x32xf32>
    %59 = vector.shape_cast %58 : vector<1x2x32xf32> to vector<2x32xf32>
    %60 = vector.shape_cast %56 : vector<2x32xf32> to vector<1x2x32xf32>
    tpu.vector_store %arg7[%57, %c0_11, %c0_12], %60 {strides = array<i32>} : memref<8x2x32xf32, #tpu.memory_space<vmem>>, vector<1x2x32xf32>,
    %c2_i32 = arith.constant 2 : i32
    %61 = arith.index_cast %c2_i32 : i32 to index
    %c0_13 = arith.constant 0 : index
    %c0_14 = arith.constant 0 : index
    %62 = vector.load %arg2[%61, %c0_13, %c0_14] : memref<8x2x4xf32, #tpu.memory_space<vmem>>, vector<1x2x4xf32>
    %63 = vector.shape_cast %62 : vector<1x2x4xf32> to vector<2x4xf32>
    %64 = vector.extract_strided_slice %63 {offsets = [0, 0], sizes = [2, 1], strides = [1, 1]} : vector<2x4xf32> to vector<2x1xf32>
    %65 = vector.broadcast %64 : vector<2x1xf32> to vector<2x32xf32>
    %66 = vector.broadcast %5 : vector<1x32xf32> to vector<2x32xf32>
    %67 = arith.mulf %65, %66 : vector<2x32xf32>
    %68 = vector.extract_strided_slice %63 {offsets = [0, 1], sizes = [2, 1], strides = [1, 1]} : vector<2x4xf32> to vector<2x1xf32>
    %69 = vector.broadcast %68 : vector<2x1xf32> to vector<2x32xf32>
    %70 = vector.broadcast %6 : vector<1x32xf32> to vector<2x32xf32>
    %71 = arith.mulf %69, %70 : vector<2x32xf32>
    %72 = arith.addf %67, %71 : vector<2x32xf32>
    %73 = vector.extract_strided_slice %63 {offsets = [0, 2], sizes = [2, 1], strides = [1, 1]} : vector<2x4xf32> to vector<2x1xf32>
    %74 = vector.broadcast %73 : vector<2x1xf32> to vector<2x32xf32>
    %75 = vector.broadcast %7 : vector<1x32xf32> to vector<2x32xf32>
    %76 = arith.mulf %74, %75 : vector<2x32xf32>
    %77 = arith.addf %72, %76 : vector<2x32xf32>
    %78 = vector.extract_strided_slice %63 {offsets = [0, 3], sizes = [2, 1], strides = [1, 1]} : vector<2x4xf32> to vector<2x1xf32>
    %79 = vector.broadcast %78 : vector<2x1xf32> to vector<2x32xf32>
    %80 = vector.broadcast %8 : vector<1x32xf32> to vector<2x32xf32>
    %81 = arith.mulf %79, %80 : vector<2x32xf32>
    %82 = arith.addf %77, %81 : vector<2x32xf32>
    %83 = arith.index_cast %c2_i32 : i32 to index
    %c0_15 = arith.constant 0 : index
    %c0_16 = arith.constant 0 : index
    %84 = vector.load %arg7[%83, %c0_15, %c0_16] : memref<8x2x32xf32, #tpu.memory_space<vmem>>, vector<1x2x32xf32>
    %85 = vector.shape_cast %84 : vector<1x2x32xf32> to vector<2x32xf32>
    %86 = vector.shape_cast %82 : vector<2x32xf32> to vector<1x2x32xf32>
    tpu.vector_store %arg7[%83, %c0_15, %c0_16], %86 {strides = array<i32>} : memref<8x2x32xf32, #tpu.memory_space<vmem>>, vector<1x2x32xf32>,
    %c3_i32 = arith.constant 3 : i32
    %87 = arith.index_cast %c3_i32 : i32 to index
    %c0_17 = arith.constant 0 : index
    %c0_18 = arith.constant 0 : index
    %88 = vector.load %arg2[%87, %c0_17, %c0_18] : memref<8x2x4xf32, #tpu.memory_space<vmem>>, vector<1x2x4xf32>
    %89 = vector.shape_cast %88 : vector<1x2x4xf32> to vector<2x4xf32>
    %90 = vector.extract_strided_slice %89 {offsets = [0, 0], sizes = [2, 1], strides = [1, 1]} : vector<2x4xf32> to vector<2x1xf32>
    %91 = vector.broadcast %90 : vector<2x1xf32> to vector<2x32xf32>
    %92 = vector.broadcast %5 : vector<1x32xf32> to vector<2x32xf32>
    %93 = arith.mulf %91, %92 : vector<2x32xf32>
    %94 = vector.extract_strided_slice %89 {offsets = [0, 1], sizes = [2, 1], strides = [1, 1]} : vector<2x4xf32> to vector<2x1xf32>
    %95 = vector.broadcast %94 : vector<2x1xf32> to vector<2x32xf32>
    %96 = vector.broadcast %6 : vector<1x32xf32> to vector<2x32xf32>
    %97 = arith.mulf %95, %96 : vector<2x32xf32>
    %98 = arith.addf %93, %97 : vector<2x32xf32>
    %99 = vector.extract_strided_slice %89 {offsets = [0, 2], sizes = [2, 1], strides = [1, 1]} : vector<2x4xf32> to vector<2x1xf32>
    %100 = vector.broadcast %99 : vector<2x1xf32> to vector<2x32xf32>
    %101 = vector.broadcast %7 : vector<1x32xf32> to vector<2x32xf32>
    %102 = arith.mulf %100, %101 : vector<2x32xf32>
    %103 = arith.addf %98, %102 : vector<2x32xf32>
    %104 = vector.extract_strided_slice %89 {offsets = [0, 3], sizes = [2, 1], strides = [1, 1]} : vector<2x4xf32> to vector<2x1xf32>
    %105 = vector.broadcast %104 : vector<2x1xf32> to vector<2x32xf32>
    %106 = vector.broadcast %8 : vector<1x32xf32> to vector<2x32xf32>
    %107 = arith.mulf %105, %106 : vector<2x32xf32>
    %108 = arith.addf %103, %107 : vector<2x32xf32>
    %109 = arith.index_cast %c3_i32 : i32 to index
    %c0_19 = arith.constant 0 : index
    %c0_20 = arith.constant 0 : index
    %110 = vector.load %arg7[%109, %c0_19, %c0_20] : memref<8x2x32xf32, #tpu.memory_space<vmem>>, vector<1x2x32xf32>
    %111 = vector.shape_cast %110 : vector<1x2x32xf32> to vector<2x32xf32>
    %112 = vector.shape_cast %108 : vector<2x32xf32> to vector<1x2x32xf32>
    tpu.vector_store %arg7[%109, %c0_19, %c0_20], %112 {strides = array<i32>} : memref<8x2x32xf32, #tpu.memory_space<vmem>>, vector<1x2x32xf32>,
    %c4_i32 = arith.constant 4 : i32
    %113 = arith.index_cast %c4_i32 : i32 to index
    %c0_21 = arith.constant 0 : index
    %c0_22 = arith.constant 0 : index
    %114 = vector.load %arg2[%113, %c0_21, %c0_22] : memref<8x2x4xf32, #tpu.memory_space<vmem>>, vector<1x2x4xf32>
    %115 = vector.shape_cast %114 : vector<1x2x4xf32> to vector<2x4xf32>
    %116 = vector.extract_strided_slice %115 {offsets = [0, 0], sizes = [2, 1], strides = [1, 1]} : vector<2x4xf32> to vector<2x1xf32>
    %117 = vector.broadcast %116 : vector<2x1xf32> to vector<2x32xf32>
    %118 = vector.broadcast %5 : vector<1x32xf32> to vector<2x32xf32>
    %119 = arith.mulf %117, %118 : vector<2x32xf32>
    %120 = vector.extract_strided_slice %115 {offsets = [0, 1], sizes = [2, 1], strides = [1, 1]} : vector<2x4xf32> to vector<2x1xf32>
    %121 = vector.broadcast %120 : vector<2x1xf32> to vector<2x32xf32>
    %122 = vector.broadcast %6 : vector<1x32xf32> to vector<2x32xf32>
    %123 = arith.mulf %121, %122 : vector<2x32xf32>
    %124 = arith.addf %119, %123 : vector<2x32xf32>
    %125 = vector.extract_strided_slice %115 {offsets = [0, 2], sizes = [2, 1], strides = [1, 1]} : vector<2x4xf32> to vector<2x1xf32>
    %126 = vector.broadcast %125 : vector<2x1xf32> to vector<2x32xf32>
    %127 = vector.broadcast %7 : vector<1x32xf32> to vector<2x32xf32>
    %128 = arith.mulf %126, %127 : vector<2x32xf32>
    %129 = arith.addf %124, %128 : vector<2x32xf32>
    %130 = vector.extract_strided_slice %115 {offsets = [0, 3], sizes = [2, 1], strides = [1, 1]} : vector<2x4xf32> to vector<2x1xf32>
    %131 = vector.broadcast %130 : vector<2x1xf32> to vector<2x32xf32>
    %132 = vector.broadcast %8 : vector<1x32xf32> to vector<2x32xf32>
    %133 = arith.mulf %131, %132 : vector<2x32xf32>
    %134 = arith.addf %129, %133 : vector<2x32xf32>
    %135 = arith.index_cast %c4_i32 : i32 to index
    %c0_23 = arith.constant 0 : index
    %c0_24 = arith.constant 0 : index
    %136 = vector.load %arg7[%135, %c0_23, %c0_24] : memref<8x2x32xf32, #tpu.memory_space<vmem>>, vector<1x2x32xf32>
    %137 = vector.shape_cast %136 : vector<1x2x32xf32> to vector<2x32xf32>
    %138 = vector.shape_cast %134 : vector<2x32xf32> to vector<1x2x32xf32>
    tpu.vector_store %arg7[%135, %c0_23, %c0_24], %138 {strides = array<i32>} : memref<8x2x32xf32, #tpu.memory_space<vmem>>, vector<1x2x32xf32>,
    %c5_i32 = arith.constant 5 : i32
    %139 = arith.index_cast %c5_i32 : i32 to index
    %c0_25 = arith.constant 0 : index
    %c0_26 = arith.constant 0 : index
    %140 = vector.load %arg2[%139, %c0_25, %c0_26] : memref<8x2x4xf32, #tpu.memory_space<vmem>>, vector<1x2x4xf32>
    %141 = vector.shape_cast %140 : vector<1x2x4xf32> to vector<2x4xf32>
    %142 = vector.extract_strided_slice %141 {offsets = [0, 0], sizes = [2, 1], strides = [1, 1]} : vector<2x4xf32> to vector<2x1xf32>
    %143 = vector.broadcast %142 : vector<2x1xf32> to vector<2x32xf32>
    %144 = vector.broadcast %5 : vector<1x32xf32> to vector<2x32xf32>
    %145 = arith.mulf %143, %144 : vector<2x32xf32>
    %146 = vector.extract_strided_slice %141 {offsets = [0, 1], sizes = [2, 1], strides = [1, 1]} : vector<2x4xf32> to vector<2x1xf32>
    %147 = vector.broadcast %146 : vector<2x1xf32> to vector<2x32xf32>
    %148 = vector.broadcast %6 : vector<1x32xf32> to vector<2x32xf32>
    %149 = arith.mulf %147, %148 : vector<2x32xf32>
    %150 = arith.addf %145, %149 : vector<2x32xf32>
    %151 = vector.extract_strided_slice %141 {offsets = [0, 2], sizes = [2, 1], strides = [1, 1]} : vector<2x4xf32> to vector<2x1xf32>
    %152 = vector.broadcast %151 : vector<2x1xf32> to vector<2x32xf32>
    %153 = vector.broadcast %7 : vector<1x32xf32> to vector<2x32xf32>
    %154 = arith.mulf %152, %153 : vector<2x32xf32>
    %155 = arith.addf %150, %154 : vector<2x32xf32>
    %156 = vector.extract_strided_slice %141 {offsets = [0, 3], sizes = [2, 1], strides = [1, 1]} : vector<2x4xf32> to vector<2x1xf32>
    %157 = vector.broadcast %156 : vector<2x1xf32> to vector<2x32xf32>
    %158 = vector.broadcast %8 : vector<1x32xf32> to vector<2x32xf32>
    %159 = arith.mulf %157, %158 : vector<2x32xf32>
    %160 = arith.addf %155, %159 : vector<2x32xf32>
    %161 = arith.index_cast %c5_i32 : i32 to index
    %c0_27 = arith.constant 0 : index
    %c0_28 = arith.constant 0 : index
    %162 = vector.load %arg7[%161, %c0_27, %c0_28] : memref<8x2x32xf32, #tpu.memory_space<vmem>>, vector<1x2x32xf32>
    %163 = vector.shape_cast %162 : vector<1x2x32xf32> to vector<2x32xf32>
    %164 = vector.shape_cast %160 : vector<2x32xf32> to vector<1x2x32xf32>
    tpu.vector_store %arg7[%161, %c0_27, %c0_28], %164 {strides = array<i32>} : memref<8x2x32xf32, #tpu.memory_space<vmem>>, vector<1x2x32xf32>,
    %c6_i32 = arith.constant 6 : i32
    %165 = arith.index_cast %c6_i32 : i32 to index
    %c0_29 = arith.constant 0 : index
    %c0_30 = arith.constant 0 : index
    %166 = vector.load %arg2[%165, %c0_29, %c0_30] : memref<8x2x4xf32, #tpu.memory_space<vmem>>, vector<1x2x4xf32>
    %167 = vector.shape_cast %166 : vector<1x2x4xf32> to vector<2x4xf32>
    %168 = vector.extract_strided_slice %167 {offsets = [0, 0], sizes = [2, 1], strides = [1, 1]} : vector<2x4xf32> to vector<2x1xf32>
    %169 = vector.broadcast %168 : vector<2x1xf32> to vector<2x32xf32>
    %170 = vector.broadcast %5 : vector<1x32xf32> to vector<2x32xf32>
    %171 = arith.mulf %169, %170 : vector<2x32xf32>
    %172 = vector.extract_strided_slice %167 {offsets = [0, 1], sizes = [2, 1], strides = [1, 1]} : vector<2x4xf32> to vector<2x1xf32>
    %173 = vector.broadcast %172 : vector<2x1xf32> to vector<2x32xf32>
    %174 = vector.broadcast %6 : vector<1x32xf32> to vector<2x32xf32>
    %175 = arith.mulf %173, %174 : vector<2x32xf32>
    %176 = arith.addf %171, %175 : vector<2x32xf32>
    %177 = vector.extract_strided_slice %167 {offsets = [0, 2], sizes = [2, 1], strides = [1, 1]} : vector<2x4xf32> to vector<2x1xf32>
    %178 = vector.broadcast %177 : vector<2x1xf32> to vector<2x32xf32>
    %179 = vector.broadcast %7 : vector<1x32xf32> to vector<2x32xf32>
    %180 = arith.mulf %178, %179 : vector<2x32xf32>
    %181 = arith.addf %176, %180 : vector<2x32xf32>
    %182 = vector.extract_strided_slice %167 {offsets = [0, 3], sizes = [2, 1], strides = [1, 1]} : vector<2x4xf32> to vector<2x1xf32>
    %183 = vector.broadcast %182 : vector<2x1xf32> to vector<2x32xf32>
    %184 = vector.broadcast %8 : vector<1x32xf32> to vector<2x32xf32>
    %185 = arith.mulf %183, %184 : vector<2x32xf32>
    %186 = arith.addf %181, %185 : vector<2x32xf32>
    %187 = arith.index_cast %c6_i32 : i32 to index
    %c0_31 = arith.constant 0 : index
    %c0_32 = arith.constant 0 : index
    %188 = vector.load %arg7[%187, %c0_31, %c0_32] : memref<8x2x32xf32, #tpu.memory_space<vmem>>, vector<1x2x32xf32>
    %189 = vector.shape_cast %188 : vector<1x2x32xf32> to vector<2x32xf32>
    %190 = vector.shape_cast %186 : vector<2x32xf32> to vector<1x2x32xf32>
    tpu.vector_store %arg7[%187, %c0_31, %c0_32], %190 {strides = array<i32>} : memref<8x2x32xf32, #tpu.memory_space<vmem>>, vector<1x2x32xf32>,
    %c7_i32 = arith.constant 7 : i32
    %191 = arith.index_cast %c7_i32 : i32 to index
    %c0_33 = arith.constant 0 : index
    %c0_34 = arith.constant 0 : index
    %192 = vector.load %arg2[%191, %c0_33, %c0_34] : memref<8x2x4xf32, #tpu.memory_space<vmem>>, vector<1x2x4xf32>
    %193 = vector.shape_cast %192 : vector<1x2x4xf32> to vector<2x4xf32>
    %194 = vector.extract_strided_slice %193 {offsets = [0, 0], sizes = [2, 1], strides = [1, 1]} : vector<2x4xf32> to vector<2x1xf32>
    %195 = vector.broadcast %194 : vector<2x1xf32> to vector<2x32xf32>
    %196 = vector.broadcast %5 : vector<1x32xf32> to vector<2x32xf32>
    %197 = arith.mulf %195, %196 : vector<2x32xf32>
    %198 = vector.extract_strided_slice %193 {offsets = [0, 1], sizes = [2, 1], strides = [1, 1]} : vector<2x4xf32> to vector<2x1xf32>
    %199 = vector.broadcast %198 : vector<2x1xf32> to vector<2x32xf32>
    %200 = vector.broadcast %6 : vector<1x32xf32> to vector<2x32xf32>
    %201 = arith.mulf %199, %200 : vector<2x32xf32>
    %202 = arith.addf %197, %201 : vector<2x32xf32>
    %203 = vector.extract_strided_slice %193 {offsets = [0, 2], sizes = [2, 1], strides = [1, 1]} : vector<2x4xf32> to vector<2x1xf32>
    %204 = vector.broadcast %203 : vector<2x1xf32> to vector<2x32xf32>
    %205 = vector.broadcast %7 : vector<1x32xf32> to vector<2x32xf32>
    %206 = arith.mulf %204, %205 : vector<2x32xf32>
    %207 = arith.addf %202, %206 : vector<2x32xf32>
    %208 = vector.extract_strided_slice %193 {offsets = [0, 3], sizes = [2, 1], strides = [1, 1]} : vector<2x4xf32> to vector<2x1xf32>
    %209 = vector.broadcast %208 : vector<2x1xf32> to vector<2x32xf32>
    %210 = vector.broadcast %8 : vector<1x32xf32> to vector<2x32xf32>
    %211 = arith.mulf %209, %210 : vector<2x32xf32>
    %212 = arith.addf %207, %211 : vector<2x32xf32>
    %213 = arith.index_cast %c7_i32 : i32 to index
    %c0_35 = arith.constant 0 : index
    %c0_36 = arith.constant 0 : index
    %214 = vector.load %arg7[%213, %c0_35, %c0_36] : memref<8x2x32xf32, #tpu.memory_space<vmem>>, vector<1x2x32xf32>
    %215 = vector.shape_cast %214 : vector<1x2x32xf32> to vector<2x32xf32>
    %216 = vector.shape_cast %212 : vector<2x32xf32> to vector<1x2x32xf32>
    tpu.vector_store %arg7[%213, %c0_35, %c0_36], %216 {strides = array<i32>} : memref<8x2x32xf32, #tpu.memory_space<vmem>>, vector<1x2x32xf32>,
    %c8_i32 = arith.constant 8 : i32
    %c0_37 = arith.constant 0 : index
    %c0_38 = arith.constant 0 : index
    %217 = vector.load %arg8[%c0_37, %c0_38] : memref<2x32xf32, #tpu.memory_space<vmem>>, vector<2x32xf32>
    %c0_i32_39 = arith.constant 0 : i32
    %218 = math.tanh %217 : vector<2x32xf32>
    %219 = arith.truncf %218 : vector<2x32xf32> to vector<2x32xbf16>
    %cst = arith.constant dense<0.000000e+00> : vector<2x32xf32>
    %220 = tpu.matmul %219, %4, %cst {dimension_numbers = #tpu.dot_dimension_numbers<[1], [1], [0], [0], [0, 0, 1, 0], [], []>} : vector<2x32xbf16>, vector<32x32xbf16>, vector<2x32xf32> -> vector<2x32xf32>
    %cst_40 = arith.constant 8.000000e-01 : f32
    %221 = vector.broadcast %cst_40 : f32 to vector<2x32xf32>
    %222 = arith.mulf %221, %217 : vector<2x32xf32>
    %223 = arith.addf %222, %220 : vector<2x32xf32>
    %224 = arith.index_cast %c0_i32_39 : i32 to index
    %c0_41 = arith.constant 0 : index
    %c0_42 = arith.constant 0 : index
    %225 = vector.load %arg7[%224, %c0_41, %c0_42] : memref<8x2x32xf32, #tpu.memory_space<vmem>>, vector<1x2x32xf32>
    %226 = vector.shape_cast %225 : vector<1x2x32xf32> to vector<2x32xf32>
    %227 = arith.addf %223, %226 : vector<2x32xf32>
    %228 = arith.index_cast %c0_i32_39 : i32 to index
    %c0_43 = arith.constant 0 : index
    %c0_44 = arith.constant 0 : index
    %229 = vector.load %arg6[%228, %c0_43, %c0_44] : memref<8x2x32xf32, #tpu.memory_space<vmem>>, vector<1x2x32xf32>
    %230 = vector.shape_cast %229 : vector<1x2x32xf32> to vector<2x32xf32>
    %231 = vector.shape_cast %227 : vector<2x32xf32> to vector<1x2x32xf32>
    tpu.vector_store %arg6[%228, %c0_43, %c0_44], %231 {strides = array<i32>} : memref<8x2x32xf32, #tpu.memory_space<vmem>>, vector<1x2x32xf32>,
    %c1_i32_45 = arith.constant 1 : i32
    %232 = math.tanh %227 : vector<2x32xf32>
    %233 = arith.truncf %232 : vector<2x32xf32> to vector<2x32xbf16>
    %cst_46 = arith.constant dense<0.000000e+00> : vector<2x32xf32>
    %234 = tpu.matmul %233, %4, %cst_46 {dimension_numbers = #tpu.dot_dimension_numbers<[1], [1], [0], [0], [0, 0, 1, 0], [], []>} : vector<2x32xbf16>, vector<32x32xbf16>, vector<2x32xf32> -> vector<2x32xf32>
    %cst_47 = arith.constant 8.000000e-01 : f32
    %235 = vector.broadcast %cst_47 : f32 to vector<2x32xf32>
    %236 = arith.mulf %235, %227 : vector<2x32xf32>
    %237 = arith.addf %236, %234 : vector<2x32xf32>
    %238 = arith.index_cast %c1_i32_45 : i32 to index
    %c0_48 = arith.constant 0 : index
    %c0_49 = arith.constant 0 : index
    %239 = vector.load %arg7[%238, %c0_48, %c0_49] : memref<8x2x32xf32, #tpu.memory_space<vmem>>, vector<1x2x32xf32>
    %240 = vector.shape_cast %239 : vector<1x2x32xf32> to vector<2x32xf32>
    %241 = arith.addf %237, %240 : vector<2x32xf32>
    %242 = arith.index_cast %c1_i32_45 : i32 to index
    %c0_50 = arith.constant 0 : index
    %c0_51 = arith.constant 0 : index
    %243 = vector.load %arg6[%242, %c0_50, %c0_51] : memref<8x2x32xf32, #tpu.memory_space<vmem>>, vector<1x2x32xf32>
    %244 = vector.shape_cast %243 : vector<1x2x32xf32> to vector<2x32xf32>
    %245 = vector.shape_cast %241 : vector<2x32xf32> to vector<1x2x32xf32>
    tpu.vector_store %arg6[%242, %c0_50, %c0_51], %245 {strides = array<i32>} : memref<8x2x32xf32, #tpu.memory_space<vmem>>, vector<1x2x32xf32>,
    %c2_i32_52 = arith.constant 2 : i32
    %246 = math.tanh %241 : vector<2x32xf32>
    %247 = arith.truncf %246 : vector<2x32xf32> to vector<2x32xbf16>
    %cst_53 = arith.constant dense<0.000000e+00> : vector<2x32xf32>
    %248 = tpu.matmul %247, %4, %cst_53 {dimension_numbers = #tpu.dot_dimension_numbers<[1], [1], [0], [0], [0, 0, 1, 0], [], []>} : vector<2x32xbf16>, vector<32x32xbf16>, vector<2x32xf32> -> vector<2x32xf32>
    %cst_54 = arith.constant 8.000000e-01 : f32
    %249 = vector.broadcast %cst_54 : f32 to vector<2x32xf32>
    %250 = arith.mulf %249, %241 : vector<2x32xf32>
    %251 = arith.addf %250, %248 : vector<2x32xf32>
    %252 = arith.index_cast %c2_i32_52 : i32 to index
    %c0_55 = arith.constant 0 : index
    %c0_56 = arith.constant 0 : index
    %253 = vector.load %arg7[%252, %c0_55, %c0_56] : memref<8x2x32xf32, #tpu.memory_space<vmem>>, vector<1x2x32xf32>
    %254 = vector.shape_cast %253 : vector<1x2x32xf32> to vector<2x32xf32>
    %255 = arith.addf %251, %254 : vector<2x32xf32>
    %256 = arith.index_cast %c2_i32_52 : i32 to index
    %c0_57 = arith.constant 0 : index
    %c0_58 = arith.constant 0 : index
    %257 = vector.load %arg6[%256, %c0_57, %c0_58] : memref<8x2x32xf32, #tpu.memory_space<vmem>>, vector<1x2x32xf32>
    %258 = vector.shape_cast %257 : vector<1x2x32xf32> to vector<2x32xf32>
    %259 = vector.shape_cast %255 : vector<2x32xf32> to vector<1x2x32xf32>
    tpu.vector_store %arg6[%256, %c0_57, %c0_58], %259 {strides = array<i32>} : memref<8x2x32xf32, #tpu.memory_space<vmem>>, vector<1x2x32xf32>,
    %c3_i32_59 = arith.constant 3 : i32
    %260 = math.tanh %255 : vector<2x32xf32>
    %261 = arith.truncf %260 : vector<2x32xf32> to vector<2x32xbf16>
    %cst_60 = arith.constant dense<0.000000e+00> : vector<2x32xf32>
    %262 = tpu.matmul %261, %4, %cst_60 {dimension_numbers = #tpu.dot_dimension_numbers<[1], [1], [0], [0], [0, 0, 1, 0], [], []>} : vector<2x32xbf16>, vector<32x32xbf16>, vector<2x32xf32> -> vector<2x32xf32>
    %cst_61 = arith.constant 8.000000e-01 : f32
    %263 = vector.broadcast %cst_61 : f32 to vector<2x32xf32>
    %264 = arith.mulf %263, %255 : vector<2x32xf32>
    %265 = arith.addf %264, %262 : vector<2x32xf32>
    %266 = arith.index_cast %c3_i32_59 : i32 to index
    %c0_62 = arith.constant 0 : index
    %c0_63 = arith.constant 0 : index
    %267 = vector.load %arg7[%266, %c0_62, %c0_63] : memref<8x2x32xf32, #tpu.memory_space<vmem>>, vector<1x2x32xf32>
    %268 = vector.shape_cast %267 : vector<1x2x32xf32> to vector<2x32xf32>
    %269 = arith.addf %265, %268 : vector<2x32xf32>
    %270 = arith.index_cast %c3_i32_59 : i32 to index
    %c0_64 = arith.constant 0 : index
    %c0_65 = arith.constant 0 : index
    %271 = vector.load %arg6[%270, %c0_64, %c0_65] : memref<8x2x32xf32, #tpu.memory_space<vmem>>, vector<1x2x32xf32>
    %272 = vector.shape_cast %271 : vector<1x2x32xf32> to vector<2x32xf32>
    %273 = vector.shape_cast %269 : vector<2x32xf32> to vector<1x2x32xf32>
    tpu.vector_store %arg6[%270, %c0_64, %c0_65], %273 {strides = array<i32>} : memref<8x2x32xf32, #tpu.memory_space<vmem>>, vector<1x2x32xf32>,
    %c4_i32_66 = arith.constant 4 : i32
    %274 = math.tanh %269 : vector<2x32xf32>
    %275 = arith.truncf %274 : vector<2x32xf32> to vector<2x32xbf16>
    %cst_67 = arith.constant dense<0.000000e+00> : vector<2x32xf32>
    %276 = tpu.matmul %275, %4, %cst_67 {dimension_numbers = #tpu.dot_dimension_numbers<[1], [1], [0], [0], [0, 0, 1, 0], [], []>} : vector<2x32xbf16>, vector<32x32xbf16>, vector<2x32xf32> -> vector<2x32xf32>
    %cst_68 = arith.constant 8.000000e-01 : f32
    %277 = vector.broadcast %cst_68 : f32 to vector<2x32xf32>
    %278 = arith.mulf %277, %269 : vector<2x32xf32>
    %279 = arith.addf %278, %276 : vector<2x32xf32>
    %280 = arith.index_cast %c4_i32_66 : i32 to index
    %c0_69 = arith.constant 0 : index
    %c0_70 = arith.constant 0 : index
    %281 = vector.load %arg7[%280, %c0_69, %c0_70] : memref<8x2x32xf32, #tpu.memory_space<vmem>>, vector<1x2x32xf32>
    %282 = vector.shape_cast %281 : vector<1x2x32xf32> to vector<2x32xf32>
    %283 = arith.addf %279, %282 : vector<2x32xf32>
    %284 = arith.index_cast %c4_i32_66 : i32 to index
    %c0_71 = arith.constant 0 : index
    %c0_72 = arith.constant 0 : index
    %285 = vector.load %arg6[%284, %c0_71, %c0_72] : memref<8x2x32xf32, #tpu.memory_space<vmem>>, vector<1x2x32xf32>
    %286 = vector.shape_cast %285 : vector<1x2x32xf32> to vector<2x32xf32>
    %287 = vector.shape_cast %283 : vector<2x32xf32> to vector<1x2x32xf32>
    tpu.vector_store %arg6[%284, %c0_71, %c0_72], %287 {strides = array<i32>} : memref<8x2x32xf32, #tpu.memory_space<vmem>>, vector<1x2x32xf32>,
    %c5_i32_73 = arith.constant 5 : i32
    %288 = math.tanh %283 : vector<2x32xf32>
    %289 = arith.truncf %288 : vector<2x32xf32> to vector<2x32xbf16>
    %cst_74 = arith.constant dense<0.000000e+00> : vector<2x32xf32>
    %290 = tpu.matmul %289, %4, %cst_74 {dimension_numbers = #tpu.dot_dimension_numbers<[1], [1], [0], [0], [0, 0, 1, 0], [], []>} : vector<2x32xbf16>, vector<32x32xbf16>, vector<2x32xf32> -> vector<2x32xf32>
    %cst_75 = arith.constant 8.000000e-01 : f32
    %291 = vector.broadcast %cst_75 : f32 to vector<2x32xf32>
    %292 = arith.mulf %291, %283 : vector<2x32xf32>
    %293 = arith.addf %292, %290 : vector<2x32xf32>
    %294 = arith.index_cast %c5_i32_73 : i32 to index
    %c0_76 = arith.constant 0 : index
    %c0_77 = arith.constant 0 : index
    %295 = vector.load %arg7[%294, %c0_76, %c0_77] : memref<8x2x32xf32, #tpu.memory_space<vmem>>, vector<1x2x32xf32>
    %296 = vector.shape_cast %295 : vector<1x2x32xf32> to vector<2x32xf32>
    %297 = arith.addf %293, %296 : vector<2x32xf32>
    %298 = arith.index_cast %c5_i32_73 : i32 to index
    %c0_78 = arith.constant 0 : index
    %c0_79 = arith.constant 0 : index
    %299 = vector.load %arg6[%298, %c0_78, %c0_79] : memref<8x2x32xf32, #tpu.memory_space<vmem>>, vector<1x2x32xf32>
    %300 = vector.shape_cast %299 : vector<1x2x32xf32> to vector<2x32xf32>
    %301 = vector.shape_cast %297 : vector<2x32xf32> to vector<1x2x32xf32>
    tpu.vector_store %arg6[%298, %c0_78, %c0_79], %301 {strides = array<i32>} : memref<8x2x32xf32, #tpu.memory_space<vmem>>, vector<1x2x32xf32>,
    %c6_i32_80 = arith.constant 6 : i32
    %302 = math.tanh %297 : vector<2x32xf32>
    %303 = arith.truncf %302 : vector<2x32xf32> to vector<2x32xbf16>
    %cst_81 = arith.constant dense<0.000000e+00> : vector<2x32xf32>
    %304 = tpu.matmul %303, %4, %cst_81 {dimension_numbers = #tpu.dot_dimension_numbers<[1], [1], [0], [0], [0, 0, 1, 0], [], []>} : vector<2x32xbf16>, vector<32x32xbf16>, vector<2x32xf32> -> vector<2x32xf32>
    %cst_82 = arith.constant 8.000000e-01 : f32
    %305 = vector.broadcast %cst_82 : f32 to vector<2x32xf32>
    %306 = arith.mulf %305, %297 : vector<2x32xf32>
    %307 = arith.addf %306, %304 : vector<2x32xf32>
    %308 = arith.index_cast %c6_i32_80 : i32 to index
    %c0_83 = arith.constant 0 : index
    %c0_84 = arith.constant 0 : index
    %309 = vector.load %arg7[%308, %c0_83, %c0_84] : memref<8x2x32xf32, #tpu.memory_space<vmem>>, vector<1x2x32xf32>
    %310 = vector.shape_cast %309 : vector<1x2x32xf32> to vector<2x32xf32>
    %311 = arith.addf %307, %310 : vector<2x32xf32>
    %312 = arith.index_cast %c6_i32_80 : i32 to index
    %c0_85 = arith.constant 0 : index
    %c0_86 = arith.constant 0 : index
    %313 = vector.load %arg6[%312, %c0_85, %c0_86] : memref<8x2x32xf32, #tpu.memory_space<vmem>>, vector<1x2x32xf32>
    %314 = vector.shape_cast %313 : vector<1x2x32xf32> to vector<2x32xf32>
    %315 = vector.shape_cast %311 : vector<2x32xf32> to vector<1x2x32xf32>
    tpu.vector_store %arg6[%312, %c0_85, %c0_86], %315 {strides = array<i32>} : memref<8x2x32xf32, #tpu.memory_space<vmem>>, vector<1x2x32xf32>,
    %c7_i32_87 = arith.constant 7 : i32
    %316 = math.tanh %311 : vector<2x32xf32>
    %317 = arith.truncf %316 : vector<2x32xf32> to vector<2x32xbf16>
    %cst_88 = arith.constant dense<0.000000e+00> : vector<2x32xf32>
    %318 = tpu.matmul %317, %4, %cst_88 {dimension_numbers = #tpu.dot_dimension_numbers<[1], [1], [0], [0], [0, 0, 1, 0], [], []>} : vector<2x32xbf16>, vector<32x32xbf16>, vector<2x32xf32> -> vector<2x32xf32>
    %cst_89 = arith.constant 8.000000e-01 : f32
    %319 = vector.broadcast %cst_89 : f32 to vector<2x32xf32>
    %320 = arith.mulf %319, %311 : vector<2x32xf32>
    %321 = arith.addf %320, %318 : vector<2x32xf32>
    %322 = arith.index_cast %c7_i32_87 : i32 to index
    %c0_90 = arith.constant 0 : index
    %c0_91 = arith.constant 0 : index
    %323 = vector.load %arg7[%322, %c0_90, %c0_91] : memref<8x2x32xf32, #tpu.memory_space<vmem>>, vector<1x2x32xf32>
    %324 = vector.shape_cast %323 : vector<1x2x32xf32> to vector<2x32xf32>
    %325 = arith.addf %321, %324 : vector<2x32xf32>
    %326 = arith.index_cast %c7_i32_87 : i32 to index
    %c0_92 = arith.constant 0 : index
    %c0_93 = arith.constant 0 : index
    %327 = vector.load %arg6[%326, %c0_92, %c0_93] : memref<8x2x32xf32, #tpu.memory_space<vmem>>, vector<1x2x32xf32>
    %328 = vector.shape_cast %327 : vector<1x2x32xf32> to vector<2x32xf32>
    %329 = vector.shape_cast %325 : vector<2x32xf32> to vector<1x2x32xf32>
    tpu.vector_store %arg6[%326, %c0_92, %c0_93], %329 {strides = array<i32>} : memref<8x2x32xf32, #tpu.memory_space<vmem>>, vector<1x2x32xf32>,
    %c8_i32_94 = arith.constant 8 : i32
    %c0_95 = arith.constant 0 : index
    %c0_96 = arith.constant 0 : index
    %330 = vector.load %arg8[%c0_95, %c0_96] : memref<2x32xf32, #tpu.memory_space<vmem>>, vector<2x32xf32>
    tpu.vector_store %arg8[%c0_95, %c0_96], %325 {strides = array<i32>} : memref<2x32xf32, #tpu.memory_space<vmem>>, vector<2x32xf32>,
    return
  }
  func.func @transform_0(%arg0: i32, %arg1: i32) -> (i32, i32, i32) {
    %c0_i32 = arith.constant 0 : i32
    %c0_i32_0 = arith.constant 0 : i32
    return %arg1, %arg0, %c0_i32 : i32, i32, i32
  }
  func.func @transform_1(%arg0: i32, %arg1: i32) -> (i32, i32) {
    %c0_i32 = arith.constant 0 : i32
    %c0_i32_0 = arith.constant 0 : i32
    %c0_i32_1 = arith.constant 0 : i32
    return %c0_i32, %c0_i32_0 : i32, i32
  }
  func.func @transform_2(%arg0: i32, %arg1: i32) -> (i32, i32) {
    %c0_i32 = arith.constant 0 : i32
    %c0_i32_0 = arith.constant 0 : i32
    %c0_i32_1 = arith.constant 0 : i32
    return %c0_i32, %c0_i32_0 : i32, i32
  }
  func.func @transform_3(%arg0: i32, %arg1: i32) -> (i32, i32) {
    %c0_i32 = arith.constant 0 : i32
    %c0_i32_0 = arith.constant 0 : i32
    %c0_i32_1 = arith.constant 0 : i32
    return %c0_i32, %c0_i32_0 : i32, i32
  }
  func.func @transform_4(%arg0: i32, %arg1: i32) -> (i32, i32, i32) {
    %c0_i32 = arith.constant 0 : i32
    %c0_i32_0 = arith.constant 0 : i32
    return %arg1, %arg0, %c0_i32 : i32, i32, i32
  }
}

</mosaic_0001>

<llo_original>
// kernel: tpu_custom_call.1
$region0: #{tpu_custom_call.1}
  #allocation0 [shape = 'u32[]', space=smem, size = 0x4, offset = 0x4, fixed_abs, tag = 'smem constant byte address 0x4 - core index']
  #allocation1 [shape = 'u32[72,128]{1,0:T(1,128)}', space=vmem, size = 0x9000, scoped, tag = 'internal scratch']
  #allocation2 [shape = 'f32[8,2,32]{2,1,0:T(2,128)}', space=vmem, size = 0x2000, scoped, tag = 'scratch operand']
  #allocation3 [shape = 'f32[2,32]{1,0:T(2,128)}', space=vmem, size = 0x400, scoped, tag = 'scratch operand']
  %s0 = inlined_call_operand.vmem [shape: f32[8,2,4], index: 0, kind: input, shape index: {}]
  %s1 = inlined_call_operand.vmem [shape: f32[4,32], index: 1, kind: input, shape index: {}]
  %s2 = inlined_call_operand.vmem [shape: bf16[32,32], index: 2, kind: input, shape index: {}]
  %s3 = inlined_call_operand.vmem [shape: f32[1,32], index: 3, kind: input, shape index: {}]
  %s4 = inlined_call_operand.hbm [shape: f32[8,2,32], index: 4, kind: output, shape index: {}]
  %s5 = sld [smem:[#allocation0]]
  $region30: #{tpu_custom_call.1} parent=0
    _
  %s7 = ssub.s32 1, %s5
  %s8 = scalar_select 0, %s7, %s5
  $region1: #{tpu_custom_call.1} parent=0
    #allocation4 [shape = 'u8[8192]{0}', space=vmem, size = 0x2000, scoped, tag = 'output window, operand 0, single buffered']
    #allocation5 [shape = 's32[1]{0}', space=sflag, size = 0x4, scoped, tag = 'scoped memory for tpu_custom_call.1']
    %9 = vsyncpa [#allocation5], 0
    // Predicated region
    $region2: #{tpu_custom_call.1} parent=1 // pred_check
      _
    $region3: #{tpu_custom_call.1} parent=1 // pred_check_branch
      %11 = sbr.rel (0) target = $region5
    $region4: #{tpu_custom_call.1} parent=1 // pred_region
      _
    $region5: #{tpu_custom_call.1} parent=1 // pred_fallthru
      _
    // Predicated region
    $region6: #{tpu_custom_call.1} parent=1 // pred_check
      _
    $region7: #{tpu_custom_call.1} parent=1 // pred_check_branch
      %13 = sbr.rel (0) target = $region9
    $region8: #{tpu_custom_call.1} parent=1 // pred_region
      _
    $region9: #{tpu_custom_call.1} parent=1 // pred_fallthru
      _
    // Predicated region
    $region10: #{tpu_custom_call.1} parent=1 // pred_check
      _
    $region11: #{tpu_custom_call.1} parent=1 // pred_check_branch
      %15 = sbr.rel (0) target = $region13
    $region12: #{tpu_custom_call.1} parent=1 // pred_region
      _
    $region13: #{tpu_custom_call.1} parent=1 // pred_fallthru
      _
    // Predicated region
    $region14: #{tpu_custom_call.1} parent=1 // pred_check
      _
    $region15: #{tpu_custom_call.1} parent=1 // pred_check_branch
      %17 = sbr.rel (0) target = $region17
    $region16: #{tpu_custom_call.1} parent=1 // pred_region
      _
    $region17: #{tpu_custom_call.1} parent=1 // pred_fallthru
      _
    %p19 = scmp.eq.s32.totalorder 0, 0
    // Predicated region
    $region18: #{tpu_custom_call.1} parent=1 // pred_check
      %p20 = pneg %p19
    $region19: #{tpu_custom_call.1} parent=1 // pred_check_branch
      %22 = sbr.rel (%p20) target = $region21
    $region20: #{tpu_custom_call.1} parent=1 // pred_region
      %v23 = vld [vmem:[%s3] sm:$0x1]
      %v25 = vperm.slane %v23, 0
      %vm27 = vcmask 254976
      %28 = vst.msk [vmem:[#allocation3] sm:$0x3] %vm27, %v25
    $region21: #{tpu_custom_call.1} parent=1 // pred_fallthru
      _
    %v29 = vld [vmem:[%s1] sm:$0xf]
    %v30 = vld [vmem:[%s2] sm:$0xf]
    %v31 = vld [vmem:[%s2 + $0x4] sm:$0xf]
    %v32 = vld [vmem:[%s2 + $0x8] sm:$0xf]
    %v33 = vld [vmem:[%s2 + $0xc] sm:$0xf]
    %v34 = vld [vmem:[%s0] sm:$0x3]
    %36 = vset.pattern.permute.xlu0 0
    %37 = vperm.xlu0 %36, %v34
    %v38 = vpop.permute.xlu0 %37
    %v40 = vperm.slane %v29, 0
    %v41 = vmul.f32 %v38, %v40
    %42 = vset.pattern.permute.xlu0 1
    %43 = vperm.xlu0 %42, %v34
    %v44 = vpop.permute.xlu0 %43
    %v46 = vperm.slane %v29, 1
    %v47 = vmul.f32 %v44, %v46
    %v48 = vadd.f32 %v41, %v47
    %49 = vset.pattern.permute.xlu0 2
    %50 = vperm.xlu0 %49, %v34
    %v51 = vpop.permute.xlu0 %50
    %v53 = vperm.slane %v29, 2
    %v54 = vmul.f32 %v51, %v53
    %v55 = vadd.f32 %v48, %v54
    %56 = vset.pattern.permute.xlu0 3
    %57 = vperm.xlu0 %56, %v34
    %v58 = vpop.permute.xlu0 %57
    %v60 = vperm.slane %v29, 3
    %v61 = vmul.f32 %v58, %v60
    %v62 = vadd.f32 %v55, %v61
    %vm63 = vcmask 254976
    %64 = vst.msk [vmem:[#allocation2] sm:$0x3] %vm63, %v62
    %s65 = scalar_lea.vmem %s0, 2
    %v66 = vld [vmem:[%s65] sm:$0x3]
    %68 = vset.pattern.permute.xlu0 0
    %69 = vperm.xlu0 %68, %v66
    %v70 = vpop.permute.xlu0 %69
    %v72 = vmul.f32 %v70, %v40
    %73 = vset.pattern.permute.xlu0 1
    %74 = vperm.xlu0 %73, %v66
    %v75 = vpop.permute.xlu0 %74
    %v77 = vmul.f32 %v75, %v46
    %v78 = vadd.f32 %v72, %v77
    %79 = vset.pattern.permute.xlu0 2
    %80 = vperm.xlu0 %79, %v66
    %v81 = vpop.permute.xlu0 %80
    %v83 = vmul.f32 %v81, %v53
    %v84 = vadd.f32 %v78, %v83
    %85 = vset.pattern.permute.xlu0 3
    %86 = vperm.xlu0 %85, %v66
    %v87 = vpop.permute.xlu0 %86
    %v89 = vmul.f32 %v87, %v60
    %v90 = vadd.f32 %v84, %v89
    %s91 = scalar_lea.vmem [#allocation2], 2
    %92 = vst.msk [vmem:[%s91] sm:$0x3] %vm63, %v90
    %s93 = scalar_lea.vmem %s0, 4
    %v94 = vld [vmem:[%s93] sm:$0x3]
    %96 = vset.pattern.permute.xlu0 0
    %97 = vperm.xlu0 %96, %v94
    %v98 = vpop.permute.xlu0 %97
    %v100 = vmul.f32 %v98, %v40
    %101 = vset.pattern.permute.xlu0 1
    %102 = vperm.xlu0 %101, %v94
    %v103 = vpop.permute.xlu0 %102
    %v105 = vmul.f32 %v103, %v46
    %v106 = vadd.f32 %v100, %v105
    %107 = vset.pattern.permute.xlu0 2
    %108 = vperm.xlu0 %107, %v94
    %v109 = vpop.permute.xlu0 %108
    %v111 = vmul.f32 %v109, %v53
    %v112 = vadd.f32 %v106, %v111
    %113 = vset.pattern.permute.xlu0 3
    %114 = vperm.xlu0 %113, %v94
    %v115 = vpop.permute.xlu0 %114
    %v117 = vmul.f32 %v115, %v60
    %v118 = vadd.f32 %v112, %v117
    %s119 = scalar_lea.vmem [#allocation2], 4
    %120 = vst.msk [vmem:[%s119] sm:$0x3] %vm63, %v118
    %s121 = scalar_lea.vmem %s0, 6
    %v122 = vld [vmem:[%s121] sm:$0x3]
    %124 = vset.pattern.permute.xlu0 0
    %125 = vperm.xlu0 %124, %v122
    %v126 = vpop.permute.xlu0 %125
    %v128 = vmul.f32 %v126, %v40
    %129 = vset.pattern.permute.xlu0 1
    %130 = vperm.xlu0 %129, %v122
    %v131 = vpop.permute.xlu0 %130
    %v133 = vmul.f32 %v131, %v46
    %v134 = vadd.f32 %v128, %v133
    %135 = vset.pattern.permute.xlu0 2
    %136 = vperm.xlu0 %135, %v122
    %v137 = vpop.permute.xlu0 %136
    %v139 = vmul.f32 %v137, %v53
    %v140 = vadd.f32 %v134, %v139
    %141 = vset.pattern.permute.xlu0 3
    %142 = vperm.xlu0 %141, %v122
    %v143 = vpop.permute.xlu0 %142
    %v145 = vmul.f32 %v143, %v60
    %v146 = vadd.f32 %v140, %v145
    %s147 = scalar_lea.vmem [#allocation2], 6
    %148 = vst.msk [vmem:[%s147] sm:$0x3] %vm63, %v146
    %s149 = scalar_lea.vmem %s0, 8
    %v150 = vld [vmem:[%s149] sm:$0x3]
    %152 = vset.pattern.permute.xlu0 0
    %153 = vperm.xlu0 %152, %v150
    %v154 = vpop.permute.xlu0 %153
    %v156 = vmul.f32 %v154, %v40
    %157 = vset.pattern.permute.xlu0 1
    %158 = vperm.xlu0 %157, %v150
    %v159 = vpop.permute.xlu0 %158
    %v161 = vmul.f32 %v159, %v46
    %v162 = vadd.f32 %v156, %v161
    %163 = vset.pattern.permute.xlu0 2
    %164 = vperm.xlu0 %163, %v150
    %v165 = vpop.permute.xlu0 %164
    %v167 = vmul.f32 %v165, %v53
    %v168 = vadd.f32 %v162, %v167
    %169 = vset.pattern.permute.xlu0 3
    %170 = vperm.xlu0 %169, %v150
    %v171 = vpop.permute.xlu0 %170
    %v173 = vmul.f32 %v171, %v60
    %v174 = vadd.f32 %v168, %v173
    %s175 = scalar_lea.vmem [#allocation2], 8
    %176 = vst.msk [vmem:[%s175] sm:$0x3] %vm63, %v174
    %s177 = scalar_lea.vmem %s0, 10
    %v178 = vld [vmem:[%s177] sm:$0x3]
    %180 = vset.pattern.permute.xlu0 0
    %181 = vperm.xlu0 %180, %v178
    %v182 = vpop.permute.xlu0 %181
    %v184 = vmul.f32 %v182, %v40
    %185 = vset.pattern.permute.xlu0 1
    %186 = vperm.xlu0 %185, %v178
    %v187 = vpop.permute.xlu0 %186
    %v189 = vmul.f32 %v187, %v46
    %v190 = vadd.f32 %v184, %v189
    %191 = vset.pattern.permute.xlu0 2
    %192 = vperm.xlu0 %191, %v178
    %v193 = vpop.permute.xlu0 %192
    %v195 = vmul.f32 %v193, %v53
    %v196 = vadd.f32 %v190, %v195
    %197 = vset.pattern.permute.xlu0 3
    %198 = vperm.xlu0 %197, %v178
    %v199 = vpop.permute.xlu0 %198
    %v201 = vmul.f32 %v199, %v60
    %v202 = vadd.f32 %v196, %v201
    %s203 = scalar_lea.vmem [#allocation2], 10
    %204 = vst.msk [vmem:[%s203] sm:$0x3] %vm63, %v202
    %s205 = scalar_lea.vmem %s0, 12
    %v206 = vld [vmem:[%s205] sm:$0x3]
    %208 = vset.pattern.permute.xlu0 0
    %209 = vperm.xlu0 %208, %v206
    %v210 = vpop.permute.xlu0 %209
    %v212 = vmul.f32 %v210, %v40
    %213 = vset.pattern.permute.xlu0 1
    %214 = vperm.xlu0 %213, %v206
    %v215 = vpop.permute.xlu0 %214
    %v217 = vmul.f32 %v215, %v46
    %v218 = vadd.f32 %v212, %v217
    %219 = vset.pattern.permute.xlu0 2
    %220 = vperm.xlu0 %219, %v206
    %v221 = vpop.permute.xlu0 %220
    %v223 = vmul.f32 %v221, %v53
    %v224 = vadd.f32 %v218, %v223
    %225 = vset.pattern.permute.xlu0 3
    %226 = vperm.xlu0 %225, %v206
    %v227 = vpop.permute.xlu0 %226
    %v229 = vmul.f32 %v227, %v60
    %v230 = vadd.f32 %v224, %v229
    %s231 = scalar_lea.vmem [#allocation2], 12
    %232 = vst.msk [vmem:[%s231] sm:$0x3] %vm63, %v230
    %s233 = scalar_lea.vmem %s0, 14
    %v234 = vld [vmem:[%s233] sm:$0x3]
    %236 = vset.pattern.permute.xlu0 0
    %237 = vperm.xlu0 %236, %v234
    %v238 = vpop.permute.xlu0 %237
    %v240 = vmul.f32 %v238, %v40
    %241 = vset.pattern.permute.xlu0 1
    %242 = vperm.xlu0 %241, %v234
    %v243 = vpop.permute.xlu0 %242
    %v245 = vmul.f32 %v243, %v46
    %v246 = vadd.f32 %v240, %v245
    %247 = vset.pattern.permute.xlu0 2
    %248 = vperm.xlu0 %247, %v234
    %v249 = vpop.permute.xlu0 %248
    %v251 = vmul.f32 %v249, %v53
    %v252 = vadd.f32 %v246, %v251
    %253 = vset.pattern.permute.xlu0 3
    %254 = vperm.xlu0 %253, %v234
    %v255 = vpop.permute.xlu0 %254
    %v257 = vmul.f32 %v255, %v60
    %v258 = vadd.f32 %v252, %v257
    %s259 = scalar_lea.vmem [#allocation2], 14
    %260 = vst.msk [vmem:[%s259] sm:$0x3] %vm63, %v258
    %v261 = vld [vmem:[#allocation3] sm:$0x3]
    %v262 = vtanh.pop %v261
    %v263 = vpack.c.bf16 %v262, %v262
    %v268 = vunpack.c.l.b16 %v30
    %v269 = vunpack.c.l.b16 %v31
    %v270 = vunpack.c.l.b16 %v32
    %v271 = vunpack.c.l.b16 %v33
    %v272 = vpack.c.b16 %v269, %v268
    %v273 = vpack.c.b16 %v271, %v270
    %vm274 = vcmask 261120
    %v276 = vsel %vm274, %v263, 0
    %v279 = vsel %vm274, %v272, 0
    %v282 = vsel %vm274, %v273, 0
    %284 = vmatpush.bf16.xpose.msra.mxu0 0
    %285 = vmatpush.bf16.xpose.msra.mxu0 0
    %286 = vmatpush.bf16.xpose.msra.mxu0 0
    %287 = vmatpush.bf16.xpose.msra.mxu0 0
    %288 = vmatpush.bf16.xpose.msra.mxu0 0
    %289 = vmatpush.bf16.xpose.msra.mxu0 0
    %290 = vmatpush.bf16.xpose.msra.mxu0 %v282
    %291 = vmatpush.bf16.xpose.msra.mxu0 %v279
    %292 = vmatmul.bf16.gmra.mxu0 %v276
    %v293 = vpop.f32.mrf.mxu0
    %v294 = vadd.f32 0.0, %v293
    %v295 = vpop.f32.mrf.mxu0
    %296 = vdwg.mxu0
    %v297 = vmul.f32 %v261, 0.8
    %v298 = vadd.f32 %v297, %v294
    %v299 = vld [vmem:[#allocation2] sm:$0x3]
    %v300 = vadd.f32 %v298, %v299
    %301 = vst.msk [vmem:[#allocation4] sm:$0x3] %vm63, %v300
    %v302 = vtanh.pop %v300
    %v303 = vpack.c.bf16 %v302, %v302
    %v305 = vsel %vm274, %v303, 0
    %307 = vmatpush.bf16.xpose.msra.mxu0 0
    %308 = vmatpush.bf16.xpose.msra.mxu0 0
    %309 = vmatpush.bf16.xpose.msra.mxu0 0
    %310 = vmatpush.bf16.xpose.msra.mxu0 0
    %311 = vmatpush.bf16.xpose.msra.mxu0 0
    %312 = vmatpush.bf16.xpose.msra.mxu0 0
    %313 = vmatpush.bf16.xpose.msra.mxu0 %v282
    %314 = vmatpush.bf16.xpose.msra.mxu0 %v279
    %315 = vmatmul.bf16.gmra.mxu0 %v305
    %v316 = vpop.f32.mrf.mxu0
    %v317 = vadd.f32 0.0, %v316
    %v318 = vpop.f32.mrf.mxu0
    %319 = vdwg.mxu0
    %v320 = vmul.f32 %v300, 0.8
    %v321 = vadd.f32 %v320, %v317
    %v322 = vld [vmem:[%s91] sm:$0x3]
    %v323 = vadd.f32 %v321, %v322
    %s324 = scalar_lea.vmem [#allocation4], 2
    %325 = vst.msk [vmem:[%s324] sm:$0x3] %vm63, %v323
    %v326 = vtanh.pop %v323
    %v327 = vpack.c.bf16 %v326, %v326
    %v329 = vsel %vm274, %v327, 0
    %331 = vmatpush.bf16.xpose.msra.mxu0 0
    %332 = vmatpush.bf16.xpose.msra.mxu0 0
    %333 = vmatpush.bf16.xpose.msra.mxu0 0
    %334 = vmatpush.bf16.xpose.msra.mxu0 0
    %335 = vmatpush.bf16.xpose.msra.mxu0 0
    %336 = vmatpush.bf16.xpose.msra.mxu0 0
    %337 = vmatpush.bf16.xpose.msra.mxu0 %v282
    %338 = vmatpush.bf16.xpose.msra.mxu0 %v279
    %339 = vmatmul.bf16.gmra.mxu0 %v329
    %v340 = vpop.f32.mrf.mxu0
    %v341 = vadd.f32 0.0, %v340
    %v342 = vpop.f32.mrf.mxu0
    %343 = vdwg.mxu0
    %v344 = vmul.f32 %v323, 0.8
    %v345 = vadd.f32 %v344, %v341
    %v346 = vld [vmem:[%s119] sm:$0x3]
    %v347 = vadd.f32 %v345, %v346
    %s348 = scalar_lea.vmem [#allocation4], 4
    %349 = vst.msk [vmem:[%s348] sm:$0x3] %vm63, %v347
    %v350 = vtanh.pop %v347
    %v351 = vpack.c.bf16 %v350, %v350
    %v353 = vsel %vm274, %v351, 0
    %355 = vmatpush.bf16.xpose.msra.mxu0 0
    %356 = vmatpush.bf16.xpose.msra.mxu0 0
    %357 = vmatpush.bf16.xpose.msra.mxu0 0
    %358 = vmatpush.bf16.xpose.msra.mxu0 0
    %359 = vmatpush.bf16.xpose.msra.mxu0 0
    %360 = vmatpush.bf16.xpose.msra.mxu0 0
    %361 = vmatpush.bf16.xpose.msra.mxu0 %v282
    %362 = vmatpush.bf16.xpose.msra.mxu0 %v279
    %363 = vmatmul.bf16.gmra.mxu0 %v353
    %v364 = vpop.f32.mrf.mxu0
    %v365 = vadd.f32 0.0, %v364
    %v366 = vpop.f32.mrf.mxu0
    %367 = vdwg.mxu0
    %v368 = vmul.f32 %v347, 0.8
    %v369 = vadd.f32 %v368, %v365
    %v370 = vld [vmem:[%s147] sm:$0x3]
    %v371 = vadd.f32 %v369, %v370
    %s372 = scalar_lea.vmem [#allocation4], 6
    %373 = vst.msk [vmem:[%s372] sm:$0x3] %vm63, %v371
    %v374 = vtanh.pop %v371
    %v375 = vpack.c.bf16 %v374, %v374
    %v377 = vsel %vm274, %v375, 0
    %379 = vmatpush.bf16.xpose.msra.mxu0 0
    %380 = vmatpush.bf16.xpose.msra.mxu0 0
    %381 = vmatpush.bf16.xpose.msra.mxu0 0
    %382 = vmatpush.bf16.xpose.msra.mxu0 0
    %383 = vmatpush.bf16.xpose.msra.mxu0 0
    %384 = vmatpush.bf16.xpose.msra.mxu0 0
    %385 = vmatpush.bf16.xpose.msra.mxu0 %v282
    %386 = vmatpush.bf16.xpose.msra.mxu0 %v279
    %387 = vmatmul.bf16.gmra.mxu0 %v377
    %v388 = vpop.f32.mrf.mxu0
    %v389 = vadd.f32 0.0, %v388
    %v390 = vpop.f32.mrf.mxu0
    %391 = vdwg.mxu0
    %v392 = vmul.f32 %v371, 0.8
    %v393 = vadd.f32 %v392, %v389
    %v394 = vld [vmem:[%s175] sm:$0x3]
    %v395 = vadd.f32 %v393, %v394
    %s396 = scalar_lea.vmem [#allocation4], 8
    %397 = vst.msk [vmem:[%s396] sm:$0x3] %vm63, %v395
    %v398 = vtanh.pop %v395
    %v399 = vpack.c.bf16 %v398, %v398
    %v401 = vsel %vm274, %v399, 0
    %403 = vmatpush.bf16.xpose.msra.mxu0 0
    %404 = vmatpush.bf16.xpose.msra.mxu0 0
    %405 = vmatpush.bf16.xpose.msra.mxu0 0
    %406 = vmatpush.bf16.xpose.msra.mxu0 0
    %407 = vmatpush.bf16.xpose.msra.mxu0 0
    %408 = vmatpush.bf16.xpose.msra.mxu0 0
    %409 = vmatpush.bf16.xpose.msra.mxu0 %v282
    %410 = vmatpush.bf16.xpose.msra.mxu0 %v279
    %411 = vmatmul.bf16.gmra.mxu0 %v401
    %v412 = vpop.f32.mrf.mxu0
    %v413 = vadd.f32 0.0, %v412
    %v414 = vpop.f32.mrf.mxu0
    %415 = vdwg.mxu0
    %v416 = vmul.f32 %v395, 0.8
    %v417 = vadd.f32 %v416, %v413
    %v418 = vld [vmem:[%s203] sm:$0x3]
    %v419 = vadd.f32 %v417, %v418
    %s420 = scalar_lea.vmem [#allocation4], 10
    %421 = vst.msk [vmem:[%s420] sm:$0x3] %vm63, %v419
    %v422 = vtanh.pop %v419
    %v423 = vpack.c.bf16 %v422, %v422
    %v425 = vsel %vm274, %v423, 0
    %427 = vmatpush.bf16.xpose.msra.mxu0 0
    %428 = vmatpush.bf16.xpose.msra.mxu0 0
    %429 = vmatpush.bf16.xpose.msra.mxu0 0
    %430 = vmatpush.bf16.xpose.msra.mxu0 0
    %431 = vmatpush.bf16.xpose.msra.mxu0 0
    %432 = vmatpush.bf16.xpose.msra.mxu0 0
    %433 = vmatpush.bf16.xpose.msra.mxu0 %v282
    %434 = vmatpush.bf16.xpose.msra.mxu0 %v279
    %435 = vmatmul.bf16.gmra.mxu0 %v425
    %v436 = vpop.f32.mrf.mxu0
    %v437 = vadd.f32 0.0, %v436
    %v438 = vpop.f32.mrf.mxu0
    %439 = vdwg.mxu0
    %v440 = vmul.f32 %v419, 0.8
    %v441 = vadd.f32 %v440, %v437
    %v442 = vld [vmem:[%s231] sm:$0x3]
    %v443 = vadd.f32 %v441, %v442
    %s444 = scalar_lea.vmem [#allocation4], 12
    %445 = vst.msk [vmem:[%s444] sm:$0x3] %vm63, %v443
    %v446 = vtanh.pop %v443
    %v447 = vpack.c.bf16 %v446, %v446
    %v449 = vsel %vm274, %v447, 0
    %451 = vmatpush.bf16.xpose.msra.mxu0 0
    %452 = vmatpush.bf16.xpose.msra.mxu0 0
    %453 = vmatpush.bf16.xpose.msra.mxu0 0
    %454 = vmatpush.bf16.xpose.msra.mxu0 0
    %455 = vmatpush.bf16.xpose.msra.mxu0 0
    %456 = vmatpush.bf16.xpose.msra.mxu0 0
    %457 = vmatpush.bf16.xpose.msra.mxu0 %v282
    %458 = vmatpush.bf16.xpose.msra.mxu0 %v279
    %459 = vmatmul.bf16.gmra.mxu0 %v449
    %v460 = vpop.f32.mrf.mxu0
    %v461 = vadd.f32 0.0, %v460
    %v462 = vpop.f32.mrf.mxu0
    %463 = vdwg.mxu0
    %v464 = vmul.f32 %v443, 0.8
    %v465 = vadd.f32 %v464, %v461
    %v466 = vld [vmem:[%s259] sm:$0x3]
    %v467 = vadd.f32 %v465, %v466
    %s468 = scalar_lea.vmem [#allocation4], 14
    %469 = vst.msk [vmem:[%s468] sm:$0x3] %vm63, %v467
    %470 = vst.msk [vmem:[#allocation3] sm:$0x3] %vm63, %v467
    // Predicated region
    $region22: #{tpu_custom_call.1} parent=1 // pred_check
      _
    $region23: #{tpu_custom_call.1} parent=1 // pred_check_branch
      %472 = sbr.rel (0) target = $region25
    $region24: #{tpu_custom_call.1} parent=1 // pred_region
      %474 = vsyncadd [#allocation5], 0
      %s475 = sshll.u32 [#allocation4], 4
      %s476 = int_to_ptr.vmem [resolvable:$true] %s475
      %s477 = sshll.u32 %s4, 4
      %s478 = int_to_ptr.hbm [resolvable:$true] %s477
      %483 = dma.vmem_to_hbm [thread:$0]  %s476, 256, %s478, [#allocation5], 32, 32, 2
    $region25: #{tpu_custom_call.1} parent=1 // pred_fallthru
      _
    // Predicated region
    $region26: #{tpu_custom_call.1} parent=1 // pred_check
      _
    $region27: #{tpu_custom_call.1} parent=1 // pred_check_branch
      %485 = sbr.rel (0) target = $region29
    $region28: #{tpu_custom_call.1} parent=1 // pred_region
      %487 = dma.done [#allocation5], 256
    $region29: #{tpu_custom_call.1} parent=1 // pred_fallthru
      _
    %488 = vsyncpa [#allocation5], 1

</llo_original>
